<compile_context>
chip_gen: v5e
topology: v5e:2x2
jax: 0.10.0
libtpu: 0.0.40
codegen_flags: <defaults>
</compile_context>

<pallas_src>
import functools
import math

import jax
import jax.numpy as jnp
from jax.experimental import pallas as pl
from jax.experimental.pallas import tpu as pltpu


# ----------------------------- tiling helpers -------------------------------

def _row_tile(rows: int) -> int:
    """Largest row tile (multiple of 8, <= 1024) dividing `rows`; else full extent."""
    for t in (1024, 512, 256, 128, 64, 32, 16, 8):
        if t <= rows and rows % t == 0:
            return t
    return rows  # block == full dim is always legal


def _lane_dense_shape(n_elems: int, d: int):
    """Pick a 2-D view (rows, lanes) with lanes a large multiple of 128 and, when
    possible, rows a multiple of 8 (full (8,128) vreg tiles, unmasked stores)."""
    candidates = [l for l in (4096, 2048, 1024, 512, 256, 128) if n_elems % l == 0]
    for lanes in candidates:
        if (n_elems // lanes) % 8 == 0:
            return n_elems // lanes, lanes
    if candidates:
        return n_elems // candidates[0], candidates[0]
    return n_elems // d, d  # fall back to the natural layout


# ------------------------------- kernels ------------------------------------

def _layernorm_kernel(x_ref, a_ref, b_ref, o_ref, *, eps: float, d: int):
    # x_ref: (tile_rows, D); a_ref/b_ref: (1, D)
    x = x_ref[...].astype(jnp.float32)
    mean = jnp.mean(x, axis=-1, keepdims=True)
    xc = x - mean
    # torch std() is unbiased (ddof=1); module divides by (std + eps), not sqrt(var+eps)
    std = jnp.sqrt(jnp.sum(xc * xc, axis=-1, keepdims=True) / (d - 1))
    y = a_ref[...].astype(jnp.float32) * xc / (std + eps) + b_ref[...].astype(jnp.float32)
    o_ref[...] = y.astype(o_ref.dtype)


def _residual_add_kernel(x_ref, sub_ref, o_ref):
    # eval mode: out = x + sublayer_out
    o_ref[...] = (x_ref[...].astype(jnp.float32)
                  + sub_ref[...].astype(jnp.float32)).astype(o_ref.dtype)


def _residual_dropout_kernel(x_ref, sub_ref, m_ref, o_ref):
    # training mode: out = x + sublayer_out * mask_scale   (mask_scale = keep/(1-p))
    o_ref[...] = (x_ref[...].astype(jnp.float32)
                  + sub_ref[...].astype(jnp.float32) * m_ref[...].astype(jnp.float32)
                  ).astype(o_ref.dtype)


# ------------------------------- wrappers ------------------------------------

def layernorm_pallas(x2d, a_2, b_2, *, eps: float = 1e-6):
    """x2d: (rows, D); a_2/b_2: (D,)."""
    rows, d = x2d.shape
    tile = _row_tile(rows)
    kernel = functools.partial(_layernorm_kernel, eps=eps, d=d)
    row_blk = pl.BlockSpec((tile, d), lambda i: (i, 0))
    par_blk = pl.BlockSpec((1, d), lambda i: (0, 0))  # shared across grid steps
    return pl.pallas_call(
        kernel,
        out_shape=jax.ShapeDtypeStruct((rows, d), x2d.dtype),
        grid=(rows // tile,),
        in_specs=[row_blk, par_blk, par_blk],
        out_specs=pl.BlockSpec((tile, d), lambda i: (i, 0)),
        compiler_params=pltpu.CompilerParams(dimension_semantics=("parallel",)),
    )(x2d, a_2.reshape(1, d), b_2.reshape(1, d))


def residual_dropout_pallas(x_flat, sub_flat, mask_scale_flat=None):
    """All inputs 1-D (n_elems,). Elementwise, so reshape to a lane-dense slab."""
    n = x_flat.shape[0]
    rows, lanes = _lane_dense_shape(n, min(n, 128))
    tile = _row_tile(rows)
    blk = pl.BlockSpec((tile, lanes), lambda i: (i, 0))

    if mask_scale_flat is None:
        kernel, operands, in_specs = _residual_add_kernel, (x_flat, sub_flat), [blk, blk]
    else:
        kernel = _residual_dropout_kernel
        operands = (x_flat, sub_flat, mask_scale_flat)
        in_specs = [blk, blk, blk]

    operands = tuple(o.reshape(rows, lanes) for o in operands)
    out2d = pl.pallas_call(
        kernel,
        out_shape=jax.ShapeDtypeStruct((rows, lanes), x_flat.dtype),
        grid=(rows // tile,),
        in_specs=in_specs,
        out_specs=blk,
        compiler_params=pltpu.CompilerParams(dimension_semantics=("parallel",)),
    )(*operands)
    return out2d.reshape(n)


def sublayer_connection_forward(x, a_2, b_2, sublayer, *, eps: float = 1e-6,
                                p: float = 0.1, training: bool = False,
                                dropout_key=None):
    """x: (B, S, D).  Returns x + dropout(sublayer(LayerNorm(x)))."""
    B, S, D = x.shape
    x2d = x.reshape(B * S, D)

    normed = layernorm_pallas(x2d, a_2, b_2, eps=eps)
    sub_out = sublayer(normed.reshape(B, S, D)).reshape(B * S, D)

    x_flat = x2d.reshape(-1)
    sub_flat = sub_out.reshape(-1)

    if training and p > 0.0:
        assert dropout_key is not None
        keep = jax.random.bernoulli(dropout_key, 1.0 - p, shape=x.shape)
        mask_scale = (keep.astype(x.dtype) * (1.0 / (1.0 - p))).reshape(-1)
        out_flat = residual_dropout_pallas(x_flat, sub_flat, mask_scale)
    else:
        out_flat = residual_dropout_pallas(x_flat, sub_flat)

    return out_flat.reshape(B, S, D)


# --------------------------------- demo --------------------------------------

if __name__ == "__main__":
    # Module config: size (d_model) = 128, dropout p = 0.1
    d_model = 128
    dropout_p = 0.1
    eps = 1e-6
    B, S = 2, 8

    key = jax.random.PRNGKey(0)
    kx, kw, kd = jax.random.split(key, 3)
    x = jax.random.normal(kx, (B, S, d_model), dtype=jnp.float32)

    # LayerNorm parameters exactly as initialized in the module.
    a_2 = jnp.ones((d_model,), jnp.float32)
    b_2 = jnp.zeros((d_model,), jnp.float32)

    # Example sublayer: a simple linear projection (plain JAX, arbitrary callable).
    W = jax.random.normal(kw, (d_model, d_model), dtype=jnp.float32) / math.sqrt(d_model)
    sublayer = lambda y: y @ W

    # ---- eval mode (dropout == identity) ----
    out = sublayer_connection_forward(x, a_2, b_2, sublayer, eps=eps,
                                      p=dropout_p, training=False)
    out = jax.block_until_ready(out)

    # Pure-JAX reference with torch LayerNorm semantics.
    mean = x.mean(-1, keepdims=True)
    xc = x - mean
    std = jnp.sqrt((xc * xc).sum(-1, keepdims=True) / (d_model - 1))
    normed_ref = a_2 * xc / (std + eps) + b_2
    sub_ref = sublayer(normed_ref)
    ref = x + sub_ref
    assert jnp.allclose(out, ref, atol=1e-5, rtol=1e-5), "eval-mode mismatch vs reference"

    # ---- training mode (mask drawn wrapper-side, so it is exactly checkable) ----
    out_tr = sublayer_connection_forward(x, a_2, b_2, sublayer, eps=eps,
                                         p=dropout_p, training=True, dropout_key=kd)
    out_tr = jax.block_until_ready(out_tr)
    keep = jax.random.bernoulli(kd, 1.0 - dropout_p, shape=x.shape)
    ref_tr = x + sub_ref * keep.astype(jnp.float32) / (1.0 - dropout_p)
    assert jnp.allclose(out_tr, ref_tr, atol=1e-5, rtol=1e-5), "training-mode mismatch"

    print("KERNEL_OK")
</pallas_src>

<mosaic_0001>
module attributes {stable_mosaic.version = 11 : i64} {
  func.func @_layernorm_kernel(%arg0: i32, %arg1: memref<16x128xf32, #tpu.memory_space<vmem>>, %arg2: memref<1x128xf32, #tpu.memory_space<vmem>>, %arg3: memref<1x128xf32, #tpu.memory_space<vmem>>, %arg4: memref<16x128xf32, #tpu.memory_space<vmem>>) attributes {dimension_semantics = [#tpu.dimension_semantics<parallel>], iteration_bounds = array<i64: 1>, scalar_prefetch = 0 : i64, scratch_operands = 0 : i64, tpu.core_type = #tpu.core_type<tc>, window_params = [{transform_indices = @transform_0, window_bounds = array<i64: 16, 128>}, {pipeline_mode = #tpu.pipeline_mode<synchronous>, transform_indices = @transform_1, window_bounds = array<i64: 1, 128>}, {pipeline_mode = #tpu.pipeline_mode<synchronous>, transform_indices = @transform_2, window_bounds = array<i64: 1, 128>}, {transform_indices = @transform_3, window_bounds = array<i64: 16, 128>}]} {
    %c0 = arith.constant 0 : index
    %c0_0 = arith.constant 0 : index
    %0 = vector.load %arg1[%c0, %c0_0] : memref<16x128xf32, #tpu.memory_space<vmem>>, vector<16x128xf32>
    %cst = arith.constant dense<0.000000e+00> : vector<16xf32>
    %1 = vector.multi_reduction <add>, %0, %cst [1] : vector<16x128xf32> to vector<16xf32>
    %2 = vector.shape_cast %1 : vector<16xf32> to vector<16x1xf32>
    %cst_1 = arith.constant 1.280000e+02 : f32
    %3 = vector.broadcast %cst_1 : f32 to vector<16x1xf32>
    %4 = arith.divf %2, %3 : vector<16x1xf32>
    %5 = vector.broadcast %4 : vector<16x1xf32> to vector<16x128xf32>
    %6 = arith.subf %0, %5 : vector<16x128xf32>
    %7 = arith.mulf %6, %6 : vector<16x128xf32>
    %cst_2 = arith.constant dense<0.000000e+00> : vector<16xf32>
    %8 = vector.multi_reduction <add>, %7, %cst_2 [1] : vector<16x128xf32> to vector<16xf32>
    %9 = vector.shape_cast %8 : vector<16xf32> to vector<16x1xf32>
    %cst_3 = arith.constant 1.270000e+02 : f32
    %10 = vector.broadcast %cst_3 : f32 to vector<16x1xf32>
    %11 = arith.divf %9, %10 : vector<16x1xf32>
    %12 = math.sqrt %11 : vector<16x1xf32>
    %c0_4 = arith.constant 0 : index
    %c0_5 = arith.constant 0 : index
    %13 = vector.load %arg2[%c0_4, %c0_5] : memref<1x128xf32, #tpu.memory_space<vmem>>, vector<1x128xf32>
    %14 = vector.broadcast %13 : vector<1x128xf32> to vector<16x128xf32>
    %15 = arith.mulf %14, %6 : vector<16x128xf32>
    %cst_6 = arith.constant 9.99999997E-7 : f32
    %16 = vector.broadcast %cst_6 : f32 to vector<16x1xf32>
    %17 = arith.addf %12, %16 : vector<16x1xf32>
    %18 = vector.broadcast %17 : vector<16x1xf32> to vector<16x128xf32>
    %19 = arith.divf %15, %18 : vector<16x128xf32>
    %c0_7 = arith.constant 0 : index
    %c0_8 = arith.constant 0 : index
    %20 = vector.load %arg3[%c0_7, %c0_8] : memref<1x128xf32, #tpu.memory_space<vmem>>, vector<1x128xf32>
    %21 = vector.broadcast %20 : vector<1x128xf32> to vector<16x128xf32>
    %22 = arith.addf %19, %21 : vector<16x128xf32>
    %c0_9 = arith.constant 0 : index
    %c0_10 = arith.constant 0 : index
    %23 = vector.load %arg4[%c0_9, %c0_10] : memref<16x128xf32, #tpu.memory_space<vmem>>, vector<16x128xf32>
    tpu.vector_store %arg4[%c0_9, %c0_10], %22 {strides = array<i32>} : memref<16x128xf32, #tpu.memory_space<vmem>>, vector<16x128xf32>,
    return
  }
  func.func @transform_0(%arg0: i32) -> (i32, i32) {
    %c0_i32 = arith.constant 0 : i32
    %c0_i32_0 = arith.constant 0 : i32
    return %arg0, %c0_i32 : i32, i32
  }
  func.func @transform_1(%arg0: i32) -> (i32, i32) {
    %c0_i32 = arith.constant 0 : i32
    %c0_i32_0 = arith.constant 0 : i32
    %c0_i32_1 = arith.constant 0 : i32
    return %c0_i32, %c0_i32_0 : i32, i32
  }
  func.func @transform_2(%arg0: i32) -> (i32, i32) {
    %c0_i32 = arith.constant 0 : i32
    %c0_i32_0 = arith.constant 0 : i32
    %c0_i32_1 = arith.constant 0 : i32
    return %c0_i32, %c0_i32_0 : i32, i32
  }
  func.func @transform_3(%arg0: i32) -> (i32, i32) {
    %c0_i32 = arith.constant 0 : i32
    %c0_i32_0 = arith.constant 0 : i32
    return %arg0, %c0_i32 : i32, i32
  }
}

</mosaic_0001>

<llo_original>
// kernel: tpu_custom_call.1
$region0: #{tpu_custom_call.1}
  #allocation0 [shape = 'u32[]', space=smem, size = 0x4, offset = 0x4, fixed_abs, tag = 'smem constant byte address 0x4 - core index']
  #allocation1 [shape = 'u32[72,128]{1,0:T(1,128)}', space=vmem, size = 0x9000, scoped, tag = 'internal scratch']
  %s0 = inlined_call_operand.hbm [shape: f32[16,128], index: 0, kind: input, shape index: {}]
  %s1 = inlined_call_operand.hbm [shape: f32[1,128], index: 1, kind: input, shape index: {}]
  %s2 = inlined_call_operand.vmem [shape: f32[1,128], index: 2, kind: input, shape index: {}]
  %s3 = inlined_call_operand.hbm [shape: f32[16,128], index: 3, kind: output, shape index: {}]
  %s4 = sld [smem:[#allocation0]]
  $region30: #{tpu_custom_call.1} parent=0
    _
  %s6 = ssub.s32 1, %s4
  %s7 = scalar_select 0, %s6, %s4
  $region1: #{tpu_custom_call.1} parent=0
    #allocation2 [shape = 'u8[8192]{0}', space=vmem, size = 0x2000, scoped, tag = 'input window, operand 0, single buffered']
    #allocation3 [shape = 's32[1]{0}', space=sflag, size = 0x4, scoped, tag = 'scoped memory for tpu_custom_call.1']
    #allocation4 [shape = 's32[1]{0}', space=sflag, size = 0x4, scoped, tag = 'scoped memory for tpu_custom_call.1']
    #allocation5 [shape = 'u8[512]{0}', space=vmem, size = 0x400, scoped, tag = 'input window, operand 1, single buffered']
    #allocation6 [shape = 's32[1]{0}', space=sflag, size = 0x4, scoped, tag = 'scoped memory for tpu_custom_call.1']
    #allocation7 [shape = 'u8[8192]{0}', space=vmem, size = 0x2000, scoped, tag = 'output window, operand 0, single buffered']
    %8 = vsyncpa [#allocation3], 0
    %9 = vsyncpa [#allocation6], 0
    %10 = vsyncpa [#allocation4], 0
    // Predicated region
    $region2: #{tpu_custom_call.1} parent=1 // pred_check
      _
    $region3: #{tpu_custom_call.1} parent=1 // pred_check_branch
      %12 = sbr.rel (0) target = $region5
    $region4: #{tpu_custom_call.1} parent=1 // pred_region
      %14 = vsyncadd [#allocation3], 0
      %s15 = sshll.u32 %s0, 4
      %s16 = int_to_ptr.hbm [resolvable:$true] %s15
      %s17 = sshll.u32 [#allocation2], 4
      %s18 = int_to_ptr.vmem [resolvable:$true] %s17
      %23 = dma.hbm_to_vmem [thread:$0]  %s16, 256, %s18, [#allocation3], 128, 128, 8
    $region5: #{tpu_custom_call.1} parent=1 // pred_fallthru
      _
    // Predicated region
    $region6: #{tpu_custom_call.1} parent=1 // pred_check
      _
    $region7: #{tpu_custom_call.1} parent=1 // pred_check_branch
      %25 = sbr.rel (0) target = $region9
    $region8: #{tpu_custom_call.1} parent=1 // pred_region
      %27 = vsyncadd [#allocation6], 0
      %s29 = sshll.u32 %s1, 4
      %s30 = int_to_ptr.hbm [resolvable:$true] %s29
      %s31 = sshll.u32 [#allocation5], 4
      %s32 = int_to_ptr.vmem [resolvable:$true] %s31
      %34 = dma.hbm_to_vmem [thread:$0]  %s30, 16, %s32, [#allocation6]
    $region9: #{tpu_custom_call.1} parent=1 // pred_fallthru
      _
    // Predicated region
    $region10: #{tpu_custom_call.1} parent=1 // pred_check
      _
    $region11: #{tpu_custom_call.1} parent=1 // pred_check_branch
      %36 = sbr.rel (0) target = $region13
    $region12: #{tpu_custom_call.1} parent=1 // pred_region
      _
    $region13: #{tpu_custom_call.1} parent=1 // pred_fallthru
      _
    // Predicated region
    $region14: #{tpu_custom_call.1} parent=1 // pred_check
      _
    $region15: #{tpu_custom_call.1} parent=1 // pred_check_branch
      %38 = sbr.rel (0) target = $region17
    $region16: #{tpu_custom_call.1} parent=1 // pred_region
      %40 = dma.done [#allocation3], 256
    $region17: #{tpu_custom_call.1} parent=1 // pred_fallthru
      _
    // Predicated region
    $region18: #{tpu_custom_call.1} parent=1 // pred_check
      _
    $region19: #{tpu_custom_call.1} parent=1 // pred_check_branch
      %42 = sbr.rel (0) target = $region21
    $region20: #{tpu_custom_call.1} parent=1 // pred_region
      %44 = dma.done [#allocation6], 16
    $region21: #{tpu_custom_call.1} parent=1 // pred_fallthru
      _
    %v45 = vld [vmem:[#allocation2] sm:$0xff]
    %v46 = vld [vmem:[#allocation2 + $0x8] sm:$0xff]
    %47 = vadd.xlane.f32.xlu0 %v45
    %v48 = vpop.xlane.xlu0 %47
    %49 = vadd.xlane.f32.xlu0 %v46
    %v50 = vpop.xlane.xlu0 %49
    %v51 = vrcp.pop 128.0
    %v52 = vmul.f32 128.0, %v51
    %v53 = vsub.f32 1.0, %v52
    %v54 = vmul.f32 %v51, %v53
    %v55 = vadd.f32 %v51, %v54
    %vm56 = vweird.f32 %v51
    %v57 = vsel %vm56, %v51, %v55
    %v58 = vmul.f32 %v48, %v57
    %v59 = vmul.f32 %v50, %v57
    %v60 = vsub.f32 %v45, %v58
    %v61 = vsub.f32 %v46, %v59
    %v62 = vmul.f32 %v60, %v60
    %v63 = vmul.f32 %v61, %v61
    %64 = vadd.xlane.f32.xlu0 %v62
    %v65 = vpop.xlane.xlu0 %64
    %66 = vadd.xlane.f32.xlu0 %v63
    %v67 = vpop.xlane.xlu0 %66
    %v68 = vrcp.pop 127.0
    %v69 = vmul.f32 127.0, %v68
    %v70 = vsub.f32 1.0, %v69
    %v71 = vmul.f32 %v68, %v70
    %v72 = vadd.f32 %v68, %v71
    %vm73 = vweird.f32 %v68
    %v74 = vsel %vm73, %v68, %v72
    %v75 = vmul.f32 %v65, %v74
    %v76 = vmul.f32 %v67, %v74
    %v77 = vrsqrt.pop %v75
    %v78 = vmul.f32 %v77, %v75
    %v79 = vmul.f32 %v78, %v77
    %v80 = vmul.f32 0.5, %v79
    %v81 = vsub.f32 1.5, %v80
    %v82 = vmul.f32 %v77, %v81
    %v83 = vmul.f32 %v75, %v82
    %vm84 = vcmp.eq.f32.partialorder %v75, inf
    %v85 = vsel %vm84, %v75, %v83
    %vm86 = vcmp.eq.f32.partialorder %v75, 0.0
    %v87 = vand.u32 %v75, 2147483648
    %v88 = vsel %vm86, %v87, %v85
    %v89 = vrsqrt.pop %v76
    %v90 = vmul.f32 %v89, %v76
    %v91 = vmul.f32 %v90, %v89
    %v92 = vmul.f32 0.5, %v91
    %v93 = vsub.f32 1.5, %v92
    %v94 = vmul.f32 %v89, %v93
    %v95 = vmul.f32 %v76, %v94
    %vm96 = vcmp.eq.f32.partialorder %v76, inf
    %v97 = vsel %vm96, %v76, %v95
    %vm98 = vcmp.eq.f32.partialorder %v76, 0.0
    %v99 = vand.u32 %v76, 2147483648
    %v100 = vsel %vm98, %v99, %v97
    %v101 = vld [vmem:[#allocation5] sm:$0x1]
    %v103 = vperm.slane %v101, 0
    %v105 = vmul.f32 %v103, %v60
    %v106 = vmul.f32 %v103, %v61
    %v107 = vadd.f32 %v88, 1e-06
    %v108 = vadd.f32 %v100, 1e-06
    %v109 = vrcp.pop %v107
    %v110 = vmul.f32 %v107, %v109
    %v111 = vsub.f32 1.0, %v110
    %v112 = vmul.f32 %v109, %v111
    %v113 = vadd.f32 %v109, %v112
    %vm114 = vweird.f32 %v107
    %vm115 = vweird.f32 %v109
    %vm116 = vmor %vm114, %vm115
    %v117 = vsel %vm116, %v109, %v113
    %v118 = vand.u32 2147483647, %v107
    %vm119 = vcmp.eq.f32.partialorder %v118, 8.507059e+37
    %v120 = vand.u32 %v107, 2147483648
    %v121 = vor.u32 1.1754944e-38, %v120
    %v122 = vsel %vm119, %v121, %v117
    %v123 = vmul.f32 %v105, %v122
    %v124 = vrcp.pop %v108
    %v125 = vmul.f32 %v108, %v124
    %v126 = vsub.f32 1.0, %v125
    %v127 = vmul.f32 %v124, %v126
    %v128 = vadd.f32 %v124, %v127
    %vm129 = vweird.f32 %v108
    %vm130 = vweird.f32 %v124
    %vm131 = vmor %vm129, %vm130
    %v132 = vsel %vm131, %v124, %v128
    %v133 = vand.u32 2147483647, %v108
    %vm134 = vcmp.eq.f32.partialorder %v133, 8.507059e+37
    %v135 = vand.u32 %v108, 2147483648
    %v136 = vor.u32 1.1754944e-38, %v135
    %v137 = vsel %vm134, %v136, %v132
    %v138 = vmul.f32 %v106, %v137
    %v139 = vld [vmem:[%s2] sm:$0x1]
    %v141 = vperm.slane %v139, 0
    %v143 = vadd.f32 %v123, %v141
    %v144 = vadd.f32 %v138, %v141
    %145 = vst [vmem:[#allocation7] sm:$0xff] %v143
    %146 = vst [vmem:[#allocation7 + $0x8] sm:$0xff] %v144
    // Predicated region
    $region22: #{tpu_custom_call.1} parent=1 // pred_check
      _
    $region23: #{tpu_custom_call.1} parent=1 // pred_check_branch
      %148 = sbr.rel (0) target = $region25
    $region24: #{tpu_custom_call.1} parent=1 // pred_region
      %150 = vsyncadd [#allocation4], 0
      %s151 = sshll.u32 [#allocation7], 4
      %s152 = int_to_ptr.vmem [resolvable:$true] %s151
      %s153 = sshll.u32 %s3, 4
      %s154 = int_to_ptr.hbm [resolvable:$true] %s153
      %159 = dma.vmem_to_hbm [thread:$0]  %s152, 256, %s154, [#allocation4], 128, 128, 8
    $region25: #{tpu_custom_call.1} parent=1 // pred_fallthru
      _
    // Predicated region
    $region26: #{tpu_custom_call.1} parent=1 // pred_check
      _
    $region27: #{tpu_custom_call.1} parent=1 // pred_check_branch
      %161 = sbr.rel (0) target = $region29
    $region28: #{tpu_custom_call.1} parent=1 // pred_region
      %163 = dma.done [#allocation4], 256
    $region29: #{tpu_custom_call.1} parent=1 // pred_fallthru
      _
    %164 = vsyncpa [#allocation3], 1
    %165 = vsyncpa [#allocation6], 1
    %166 = vsyncpa [#allocation4], 1

</llo_original>
